<compile_context>
chip_gen: v5e
topology: v5e:2x2
jax: 0.10.0
libtpu: 0.0.40
codegen_flags: <defaults>
</compile_context>

<pallas_src>
import jax
import jax.numpy as jnp
from jax.experimental import pallas as pl
from jax.experimental.pallas import tpu as pltpu


IN_FEATURES = 2
OUT_FEATURES = 2

LANE_C = 512        # lane width of each slab (multiple of 128)
MAX_TILE_R = 512    # rows per grid step (multiple of 8): 2 MiB in / 1 MiB out per block


def _round_up(x, m):
    return ((x + m - 1) // m) * m


def _relu1_kernel(w_ref, b_ref, xt_ref, o_ref):
    # w_ref : SMEM (OUT, IN)        -- scalar reads
    # b_ref : SMEM (OUT,)           -- scalar reads
    # xt_ref: VMEM (IN, TILE_R, C)  -- feature-major slabs
    # o_ref : VMEM (TILE_R, C)      -- lane- and sublane-dense output
    x0 = xt_ref[0]                       # (TILE_R, C)
    x1 = xt_ref[1]                       # (TILE_R, C)
    acc = None
    for j in range(OUT_FEATURES):        # unrolled at trace time (OUT_FEATURES == 2)
        pre = w_ref[j, 0] * x0 + w_ref[j, 1] * x1 + b_ref[j]
        term = jnp.maximum(pre, 0.0)
        acc = term if acc is None else acc + term
    o_ref[...] = acc


def model_relu1_forward(x, weight, bias, tile_r=None):
    """x: (N, IN), weight: (OUT, IN), bias: (OUT,). Returns (N,) float32.

    NOTE: torch's .squeeze() on an (N, 1) tensor with N == 1 yields a 0-d
    scalar; this wrapper always returns shape (N,).
    """
    n = x.shape[0]
    assert x.shape[1] == IN_FEATURES

    c = LANE_C
    # Pad N so R = n_pad // c is a multiple of 8 (full vreg sublanes).
    # Worst-case padding is 8*c - 1 = 4095 rows, not a whole max-size tile.
    n_pad = _round_up(max(n, 1), 8 * c)
    r = n_pad // c

    if tile_r is None:
        # >= 2 grid steps whenever possible (v7x dual-TC), ~2 MiB input blocks.
        tile_r = min(MAX_TILE_R, max(8, _round_up(pl.cdiv(r, 2), 8)))
    # Sanitize any user-supplied tile_r: multiple of 8, never exceeding R.
    tile_r = min(r, max(8, _round_up(int(tile_r), 8)))

    xf = x.astype(jnp.float32)
    if n_pad != n:
        xf = jnp.pad(xf, ((0, n_pad - n), (0, 0)))
    # Feature-major (IN, R, C) slabs; the reshape after the transpose is free.
    xt = xf.T.reshape(IN_FEATURES, r, c)

    w = weight.astype(jnp.float32).reshape(OUT_FEATURES, IN_FEATURES)
    b = bias.astype(jnp.float32).reshape(OUT_FEATURES)

    grid = (pl.cdiv(r, tile_r),)   # ragged last block handled by Pallas
    out = pl.pallas_call(
        _relu1_kernel,
        out_shape=jax.ShapeDtypeStruct((r, c), jnp.float32),
        grid=grid,
        in_specs=[
            pl.BlockSpec(memory_space=pltpu.MemorySpace.SMEM),          # weight
            pl.BlockSpec(memory_space=pltpu.MemorySpace.SMEM),          # bias
            pl.BlockSpec((IN_FEATURES, tile_r, c), lambda i: (0, i, 0)),  # x slabs
        ],
        out_specs=pl.BlockSpec((tile_r, c), lambda i: (i, 0)),
        compiler_params=pltpu.CompilerParams(
            dimension_semantics=("parallel",)),
    )(w, b, xt)

    # (R, C) row-major flattens back to sample order; drop the padded tail
    # (padded rows hold relu(b0)+relu(b1), which this slice discards).
    return out.reshape(-1)[:n]


def init_params(key):
    # kaiming_normal_(weight, nonlinearity='relu'): std = sqrt(2 / fan_in)
    std = (2.0 / IN_FEATURES) ** 0.5
    weight = std * jax.random.normal(key, (OUT_FEATURES, IN_FEATURES), dtype=jnp.float32)
    bias = jnp.zeros((OUT_FEATURES,), dtype=jnp.float32)
    return weight, bias


if __name__ == "__main__":
    key = jax.random.PRNGKey(0)
    k_w, k_x = jax.random.split(key)

    weight, bias = init_params(k_w)

    N = 200  # small, non-aligned batch: exercises padding + tail slice
    x = jax.random.normal(k_x, (N, IN_FEATURES), dtype=jnp.float32)

    y = model_relu1_forward(x, weight, bias)
    y = jax.block_until_ready(y)

    # Pure-JAX reference check
    ref = jnp.sum(jnp.maximum(x @ weight.T + bias, 0.0), axis=1)
    assert y.shape == (N,)
    assert jnp.allclose(y, ref, atol=1e-5, rtol=1e-5)

    print("KERNEL_OK")
</pallas_src>

<mosaic_0001>
module attributes {stable_mosaic.version = 11 : i64} {
  func.func @_relu1_kernel(%arg0: i32, %arg1: memref<2x2xf32, #tpu.memory_space<smem>>, %arg2: memref<2xf32, #tpu.memory_space<smem>>, %arg3: memref<2x8x512xf32, #tpu.memory_space<vmem>>, %arg4: memref<8x512xf32, #tpu.memory_space<vmem>>) attributes {dimension_semantics = [#tpu.dimension_semantics<parallel>], iteration_bounds = array<i64: 1>, scalar_prefetch = 0 : i64, scratch_operands = 0 : i64, tpu.core_type = #tpu.core_type<tc>, window_params = [{transform_indices = @transform_0, window_bounds = array<i64: 2, 2>}, {transform_indices = @transform_1, window_bounds = array<i64: 2>}, {transform_indices = @transform_2, window_bounds = array<i64: 2, 8, 512>}, {transform_indices = @transform_3, window_bounds = array<i64: 8, 512>}]} {
    %c0 = arith.constant 0 : index
    %c0_0 = arith.constant 0 : index
    %c0_1 = arith.constant 0 : index
    %0 = vector.load %arg3[%c0, %c0_0, %c0_1] : memref<2x8x512xf32, #tpu.memory_space<vmem>>, vector<1x8x512xf32>
    %1 = vector.shape_cast %0 : vector<1x8x512xf32> to vector<8x512xf32>
    %c1 = arith.constant 1 : index
    %c0_2 = arith.constant 0 : index
    %c0_3 = arith.constant 0 : index
    %2 = vector.load %arg3[%c1, %c0_2, %c0_3] : memref<2x8x512xf32, #tpu.memory_space<vmem>>, vector<1x8x512xf32>
    %3 = vector.shape_cast %2 : vector<1x8x512xf32> to vector<8x512xf32>
    %c0_4 = arith.constant 0 : index
    %c0_5 = arith.constant 0 : index
    %4 = memref.load %arg1[%c0_4, %c0_5] : memref<2x2xf32, #tpu.memory_space<smem>>
    %5 = vector.broadcast %4 : f32 to vector<8x512xf32>
    %6 = arith.mulf %5, %1 : vector<8x512xf32>
    %c0_6 = arith.constant 0 : index
    %c1_7 = arith.constant 1 : index
    %7 = memref.load %arg1[%c0_6, %c1_7] : memref<2x2xf32, #tpu.memory_space<smem>>
    %8 = vector.broadcast %7 : f32 to vector<8x512xf32>
    %9 = arith.mulf %8, %3 : vector<8x512xf32>
    %10 = arith.addf %6, %9 : vector<8x512xf32>
    %c0_8 = arith.constant 0 : index
    %11 = memref.load %arg2[%c0_8] : memref<2xf32, #tpu.memory_space<smem>>
    %12 = vector.broadcast %11 : f32 to vector<8x512xf32>
    %13 = arith.addf %10, %12 : vector<8x512xf32>
    %cst = arith.constant 0.000000e+00 : f32
    %14 = vector.broadcast %cst : f32 to vector<8x512xf32>
    %15 = arith.maximumf %13, %14 : vector<8x512xf32>
    %c1_9 = arith.constant 1 : index
    %c0_10 = arith.constant 0 : index
    %16 = memref.load %arg1[%c1_9, %c0_10] : memref<2x2xf32, #tpu.memory_space<smem>>
    %17 = vector.broadcast %16 : f32 to vector<8x512xf32>
    %18 = arith.mulf %17, %1 : vector<8x512xf32>
    %c1_11 = arith.constant 1 : index
    %c1_12 = arith.constant 1 : index
    %19 = memref.load %arg1[%c1_11, %c1_12] : memref<2x2xf32, #tpu.memory_space<smem>>
    %20 = vector.broadcast %19 : f32 to vector<8x512xf32>
    %21 = arith.mulf %20, %3 : vector<8x512xf32>
    %22 = arith.addf %18, %21 : vector<8x512xf32>
    %c1_13 = arith.constant 1 : index
    %23 = memref.load %arg2[%c1_13] : memref<2xf32, #tpu.memory_space<smem>>
    %24 = vector.broadcast %23 : f32 to vector<8x512xf32>
    %25 = arith.addf %22, %24 : vector<8x512xf32>
    %cst_14 = arith.constant 0.000000e+00 : f32
    %26 = vector.broadcast %cst_14 : f32 to vector<8x512xf32>
    %27 = arith.maximumf %25, %26 : vector<8x512xf32>
    %28 = arith.addf %15, %27 : vector<8x512xf32>
    %c0_15 = arith.constant 0 : index
    %c0_16 = arith.constant 0 : index
    %29 = vector.load %arg4[%c0_15, %c0_16] : memref<8x512xf32, #tpu.memory_space<vmem>>, vector<8x512xf32>
    tpu.vector_store %arg4[%c0_15, %c0_16], %28 {strides = array<i32>} : memref<8x512xf32, #tpu.memory_space<vmem>>, vector<8x512xf32>,
    return
  }
  func.func @transform_0(%arg0: i32) -> (i32, i32) {
    %c0_i32 = arith.constant 0 : i32
    %c0_i32_0 = arith.constant 0 : i32
    %c0_i32_1 = arith.constant 0 : i32
    return %c0_i32, %c0_i32_0 : i32, i32
  }
  func.func @transform_1(%arg0: i32) -> i32 {
    %c0_i32 = arith.constant 0 : i32
    %c0_i32_0 = arith.constant 0 : i32
    return %c0_i32 : i32
  }
  func.func @transform_2(%arg0: i32) -> (i32, i32, i32) {
    %c0_i32 = arith.constant 0 : i32
    %c0_i32_0 = arith.constant 0 : i32
    %c0_i32_1 = arith.constant 0 : i32
    return %c0_i32, %arg0, %c0_i32_0 : i32, i32, i32
  }
  func.func @transform_3(%arg0: i32) -> (i32, i32) {
    %c0_i32 = arith.constant 0 : i32
    %c0_i32_0 = arith.constant 0 : i32
    return %arg0, %c0_i32 : i32, i32
  }
}

</mosaic_0001>

<llo_original>
// kernel: tpu_custom_call.1
$region0: #{tpu_custom_call.1}
  #allocation0 [shape = 'u32[]', space=smem, size = 0x4, offset = 0x4, fixed_abs, tag = 'smem constant byte address 0x4 - core index']
  #allocation1 [shape = 'u32[72,128]{1,0:T(1,128)}', space=vmem, size = 0x9000, scoped, tag = 'internal scratch']
  %s0 = inlined_call_operand.hbm [shape: f32[2,2], index: 0, kind: input, shape index: {}]
  %s1 = inlined_call_operand.hbm [shape: f32[2], index: 1, kind: input, shape index: {}]
  %s2 = inlined_call_operand.hbm [shape: f32[2,8,512], index: 2, kind: input, shape index: {}]
  %s3 = inlined_call_operand.hbm [shape: f32[8,512], index: 3, kind: output, shape index: {}]
  %s4 = sld [smem:[#allocation0]]
  $region34: #{tpu_custom_call.1} parent=0
    _
  %s6 = ssub.s32 1, %s4
  %s7 = scalar_select 0, %s6, %s4
  $region1: #{tpu_custom_call.1} parent=0
    #allocation2 [shape = 'u8[1024]{0}', space=smem, size = 0x400, scoped, tag = 'input window, operand 0, single buffered']
    #allocation3 [shape = 's32[1]{0}', space=sflag, size = 0x4, scoped, tag = 'scoped memory for tpu_custom_call.1']
    #allocation4 [shape = 's32[1]{0}', space=sflag, size = 0x4, scoped, tag = 'scoped memory for tpu_custom_call.1']
    #allocation5 [shape = 's32[1]{0}', space=sflag, size = 0x4, scoped, tag = 'scoped memory for tpu_custom_call.1']
    #allocation6 [shape = 'u8[512]{0}', space=smem, size = 0x200, scoped, tag = 'input window, operand 1, single buffered']
    #allocation7 [shape = 's32[1]{0}', space=sflag, size = 0x4, scoped, tag = 'scoped memory for tpu_custom_call.1']
    #allocation8 [shape = 'u8[32768]{0}', space=vmem, size = 0x8000, scoped, tag = 'input window, operand 2, single buffered']
    #allocation9 [shape = 'u8[16384]{0}', space=vmem, size = 0x4000, scoped, tag = 'output window, operand 0, single buffered']
    %8 = vsyncpa [#allocation5], 0
    %9 = vsyncpa [#allocation7], 0
    %10 = vsyncpa [#allocation3], 0
    %11 = vsyncpa [#allocation4], 0
    // Predicated region
    $region2: #{tpu_custom_call.1} parent=1 // pred_check
      _
    $region3: #{tpu_custom_call.1} parent=1 // pred_check_branch
      %13 = sbr.rel (0) target = $region5
    $region4: #{tpu_custom_call.1} parent=1 // pred_region
      %15 = vsyncadd [#allocation5], 0
      %s17 = sshll.u32 %s0, 4
      %s18 = int_to_ptr.hbm [resolvable:$true] %s17
      %20 = dma.hbm_to_smem %s18, 32, [#allocation2], [#allocation5]
    $region5: #{tpu_custom_call.1} parent=1 // pred_fallthru
      _
    // Predicated region
    $region6: #{tpu_custom_call.1} parent=1 // pred_check
      _
    $region7: #{tpu_custom_call.1} parent=1 // pred_check_branch
      %22 = sbr.rel (0) target = $region9
    $region8: #{tpu_custom_call.1} parent=1 // pred_region
      %24 = vsyncadd [#allocation7], 0
      %s26 = sshll.u32 %s1, 4
      %s27 = int_to_ptr.hbm [resolvable:$true] %s26
      %29 = dma.hbm_to_smem %s27, 16, [#allocation6], [#allocation7]
    $region9: #{tpu_custom_call.1} parent=1 // pred_fallthru
      _
    // Predicated region
    $region10: #{tpu_custom_call.1} parent=1 // pred_check
      _
    $region11: #{tpu_custom_call.1} parent=1 // pred_check_branch
      %31 = sbr.rel (0) target = $region13
    $region12: #{tpu_custom_call.1} parent=1 // pred_region
      %33 = vsyncadd [#allocation3], 0
      %s34 = sshll.u32 %s2, 4
      %s35 = int_to_ptr.hbm [resolvable:$true] %s34
      %s36 = sshll.u32 [#allocation8], 4
      %s37 = int_to_ptr.vmem [resolvable:$true] %s36
      %42 = dma.hbm_to_vmem [thread:$0]  %s35, 1024, %s37, [#allocation3], 512, 512, 32
    $region13: #{tpu_custom_call.1} parent=1 // pred_fallthru
      _
    // Predicated region
    $region14: #{tpu_custom_call.1} parent=1 // pred_check
      _
    $region15: #{tpu_custom_call.1} parent=1 // pred_check_branch
      %44 = sbr.rel (0) target = $region17
    $region16: #{tpu_custom_call.1} parent=1 // pred_region
      %46 = dma.done [#allocation5], 32
    $region17: #{tpu_custom_call.1} parent=1 // pred_fallthru
      _
    // Predicated region
    $region18: #{tpu_custom_call.1} parent=1 // pred_check
      _
    $region19: #{tpu_custom_call.1} parent=1 // pred_check_branch
      %48 = sbr.rel (0) target = $region21
    $region20: #{tpu_custom_call.1} parent=1 // pred_region
      %50 = dma.done [#allocation7], 16
    $region21: #{tpu_custom_call.1} parent=1 // pred_fallthru
      _
    // Predicated region
    $region22: #{tpu_custom_call.1} parent=1 // pred_check
      _
    $region23: #{tpu_custom_call.1} parent=1 // pred_check_branch
      %52 = sbr.rel (0) target = $region25
    $region24: #{tpu_custom_call.1} parent=1 // pred_region
      %54 = dma.done [#allocation3], 1024
    $region25: #{tpu_custom_call.1} parent=1 // pred_fallthru
      _
    %55 = sfence
    %v56 = vld [vmem:[#allocation8] sm:$0xff]
    %v57 = vld [vmem:[#allocation8 + $0x8] sm:$0xff]
    %v58 = vld [vmem:[#allocation8 + $0x10] sm:$0xff]
    %v59 = vld [vmem:[#allocation8 + $0x18] sm:$0xff]
    %s60 = scalar_lea.vmem [#allocation8], 32
    %v61 = vld [vmem:[%s60] sm:$0xff]
    %v62 = vld [vmem:[%s60 + $0x8] sm:$0xff]
    %v63 = vld [vmem:[%s60 + $0x10] sm:$0xff]
    %v64 = vld [vmem:[%s60 + $0x18] sm:$0xff]
    %s65 = sld [smem:[#allocation2]]
    %v66 = vstv %s65
    %v67 = vmul.f32 %v66, %v56
    %v68 = vmul.f32 %v66, %v57
    %v69 = vmul.f32 %v66, %v58
    %v70 = vmul.f32 %v66, %v59
    %s71 = sld [smem:[#allocation2 + $0x1]]
    %v72 = vstv %s71
    %v73 = vmul.f32 %v72, %v61
    %v74 = vmul.f32 %v72, %v62
    %v75 = vmul.f32 %v72, %v63
    %v76 = vmul.f32 %v72, %v64
    %v77 = vadd.f32 %v67, %v73
    %v78 = vadd.f32 %v68, %v74
    %v79 = vadd.f32 %v69, %v75
    %v80 = vadd.f32 %v70, %v76
    %s81 = sld [smem:[#allocation6]]
    %v82 = vstv %s81
    %v83 = vadd.f32 %v77, %v82
    %v84 = vadd.f32 %v78, %v82
    %v85 = vadd.f32 %v79, %v82
    %v86 = vadd.f32 %v80, %v82
    %v87 = vmax.f32 %v83, 0.0
    %v88 = vmax.f32 %v84, 0.0
    %v89 = vmax.f32 %v85, 0.0
    %v90 = vmax.f32 %v86, 0.0
    %s91 = sld [smem:[#allocation2 + $0x80]]
    %v92 = vstv %s91
    %v93 = vmul.f32 %v92, %v56
    %v94 = vmul.f32 %v92, %v57
    %v95 = vmul.f32 %v92, %v58
    %v96 = vmul.f32 %v92, %v59
    %s97 = sld [smem:[#allocation2 + $0x81]]
    %v98 = vstv %s97
    %v99 = vmul.f32 %v98, %v61
    %v100 = vmul.f32 %v98, %v62
    %v101 = vmul.f32 %v98, %v63
    %v102 = vmul.f32 %v98, %v64
    %v103 = vadd.f32 %v93, %v99
    %v104 = vadd.f32 %v94, %v100
    %v105 = vadd.f32 %v95, %v101
    %v106 = vadd.f32 %v96, %v102
    %s107 = sld [smem:[#allocation6 + $0x1]]
    %v108 = vstv %s107
    %v109 = vadd.f32 %v103, %v108
    %v110 = vadd.f32 %v104, %v108
    %v111 = vadd.f32 %v105, %v108
    %v112 = vadd.f32 %v106, %v108
    %v113 = vmax.f32 %v109, 0.0
    %v114 = vmax.f32 %v110, 0.0
    %v115 = vmax.f32 %v111, 0.0
    %v116 = vmax.f32 %v112, 0.0
    %v117 = vadd.f32 %v87, %v113
    %v118 = vadd.f32 %v88, %v114
    %v119 = vadd.f32 %v89, %v115
    %v120 = vadd.f32 %v90, %v116
    %121 = vst [vmem:[#allocation9] sm:$0xff] %v117
    %122 = vst [vmem:[#allocation9 + $0x8] sm:$0xff] %v118
    %123 = vst [vmem:[#allocation9 + $0x10] sm:$0xff] %v119
    %124 = vst [vmem:[#allocation9 + $0x18] sm:$0xff] %v120
    // Predicated region
    $region26: #{tpu_custom_call.1} parent=1 // pred_check
      _
    $region27: #{tpu_custom_call.1} parent=1 // pred_check_branch
      %126 = sbr.rel (0) target = $region29
    $region28: #{tpu_custom_call.1} parent=1 // pred_region
      %128 = vsyncadd [#allocation4], 0
      %s130 = sshll.u32 [#allocation9], 4
      %s131 = int_to_ptr.vmem [resolvable:$true] %s130
      %s132 = sshll.u32 %s3, 4
      %s133 = int_to_ptr.hbm [resolvable:$true] %s132
      %135 = dma.vmem_to_hbm [thread:$0]  %s131, 512, %s133, [#allocation4]
    $region29: #{tpu_custom_call.1} parent=1 // pred_fallthru
      _
    // Predicated region
    $region30: #{tpu_custom_call.1} parent=1 // pred_check
      _
    $region31: #{tpu_custom_call.1} parent=1 // pred_check_branch
      %137 = sbr.rel (0) target = $region33
    $region32: #{tpu_custom_call.1} parent=1 // pred_region
      %139 = dma.done [#allocation4], 512
    $region33: #{tpu_custom_call.1} parent=1 // pred_fallthru
      _
    %140 = vsyncpa [#allocation3], 1
    %141 = vsyncpa [#allocation4], 1
    %142 = vsyncpa [#allocation5], 1
    %143 = vsyncpa [#allocation7], 1

</llo_original>
